<compile_context>
chip_gen: v7x
topology: tpu7x:2x2x1
jax: 0.10.0
libtpu: 0.0.40
codegen_flags: <defaults>
</compile_context>

<pallas_src>
import functools

import jax
import jax.numpy as jnp
from jax.experimental import pallas as pl
from jax.experimental.pallas import tpu as pltpu


def _round_up(a, b):
    return (a + b - 1) // b * b


# ---------------------------------------------------------------------------
# Fused kernel:
#   gu = x @ [Wg_tile | Wu_tile]            (tm, 2*ti)   single MXU push
#   h  = SiLU(gu[:, :ti]) * gu[:, ti:]      (tm, ti)     f32 epilogue
#   acc += h @ Wd_tile                      (tm, hidden) resident f32
# grid = (M/tm, I/ti); axis 1 (intermediate dim) is the reduction axis.
# ---------------------------------------------------------------------------
def _fused_mlp_kernel(x_ref, wgu_ref, wd_ref, y_ref, acc_ref, *, ti):
    i = pl.program_id(1)

    @pl.when(i == 0)
    def _():
        acc_ref[...] = jnp.zeros_like(acc_ref)

    x = x_ref[...]
    # Single gate+up projection for this (tm, ti) slice of the intermediate
    # dim; the gate/up panels were interleaved at weight-prep time.
    gu = jnp.dot(x, wgu_ref[...], preferred_element_type=jnp.float32)
    g = gu[:, :ti]          # static slice at a 128-lane-multiple boundary
    u = gu[:, ti:]
    h = (g * jax.nn.sigmoid(g)) * u                       # f32 SiLU(g) * u

    # Down projection of this slice, accumulated into the resident f32 tile.
    acc_ref[...] += jnp.dot(h.astype(wd_ref.dtype), wd_ref[...],
                            preferred_element_type=jnp.float32)

    @pl.when(i == pl.num_programs(1) - 1)
    def _():
        y_ref[...] = acc_ref[...].astype(y_ref.dtype)


# ---------------------------------------------------------------------------
# Generation / capacity detection (best effort, with conservative fallbacks).
# ---------------------------------------------------------------------------
def _device_kind():
    try:
        return jax.devices()[0].device_kind.lower()
    except Exception:
        return ""


def _vmem_capacity_bytes():
    try:
        info = pltpu.get_tpu_info()
        for name in ("vmem_capacity_bytes", "vmem_size_bytes", "vmem_bytes"):
            cap = getattr(info, name, None)
            if cap:
                return int(cap)
    except Exception:
        pass
    return 64 << 20          # conservative: v7x per-TensorCore VMEM


def _sublane_multiple(dtype):
    # f32 -> 8 rows/vreg, bf16 -> 16, int8/fp8 -> 32.
    return max(8, 32 // jnp.dtype(dtype).itemsize)


def _vmem_bytes(tm, ti, hidden, dtype):
    b = jnp.dtype(dtype).itemsize
    x_bytes = 2 * tm * hidden * b                        # double-buffered x
    w_bytes = 2 * (hidden * 2 * ti + ti * hidden) * b    # [Wg|Wu] + Wd, x2
    y_bytes = 2 * tm * hidden * b                        # double-buffered out
    acc_bytes = tm * hidden * 4                          # f32 accumulator
    return x_bytes + w_bytes + y_bytes + acc_bytes


def _pick_tm(m, hidden, ti, dtype, device_kind, vmem_cap):
    sub = _sublane_multiple(dtype)
    if m <= 256:
        # Decode / small batch: one M-tile covers all tokens.
        # TODO(synk): v7x decode (single M-tile) — split the intermediate axis
        # across the two TensorCores (core-parallel leading grid axis +
        # per-core partial accumulators) to use both TCs' HBM bandwidth.
        return _round_up(m, sub)

    # Weight-reuse roofline targets per generation (FLOPs per weight byte
    # ~= tm in bf16): v6e needs ~655 -> tm~1024; v7x ~311 -> tm~512 (and
    # 64 MiB VMEM forbids the v6e tile); v5e ~240 -> tm=256 is balanced.
    if "v7" in device_kind:
        target = 512
    elif "v6" in device_kind:
        target = 1024
    elif "v5" in device_kind:
        target = 256
    else:
        target = 1024 if vmem_cap >= (96 << 20) else 512

    budget = int(0.85 * vmem_cap)
    tm = 128
    for cand in (1024, 768, 512, 384, 256, 128):
        if cand <= target and _vmem_bytes(cand, ti, hidden, dtype) <= budget:
            tm = cand
            break
    return min(tm, _round_up(m, sub))


# ---------------------------------------------------------------------------
# Load-time weight preparation (OUT of the per-call hot path).
# ---------------------------------------------------------------------------
def prepare_weights(w_gate, w_up, w_down, *, ti=512, dtype=jnp.bfloat16):
    """One-time weight prep.

    torch.nn.Linear stores weights as (out_features, in_features).  We
    transpose to (in, out), zero-pad the intermediate dim up to a multiple of
    `ti` (11008 -> 11264 for ti=512; padded columns/rows contribute exactly
    zero), cast to the MXU-native compute dtype (bf16 by default), and
    interleave gate/up ti-wide panels so the kernel does a single
    x @ [Wg_tile | Wu_tile] MXU push per grid step.

    Returns:
      wgu: (n_tiles, hidden, 2*ti)  interleaved gate/up panels, (in, out)
      wd:  (I_pad, hidden)          down_proj weight, (in, out)
    """
    intermediate, hidden = w_gate.shape
    i_pad = _round_up(intermediate, ti)
    pad = i_pad - intermediate

    wg = jnp.pad(w_gate.T.astype(dtype), ((0, 0), (0, pad)))   # (H, I_pad)
    wu = jnp.pad(w_up.T.astype(dtype), ((0, 0), (0, pad)))     # (H, I_pad)
    wd = jnp.pad(w_down.T.astype(dtype), ((0, pad), (0, 0)))   # (I_pad, H)

    n_tiles = i_pad // ti
    wgu = jnp.concatenate(
        [wg.reshape(hidden, n_tiles, ti), wu.reshape(hidden, n_tiles, ti)],
        axis=-1)                                  # (H, n_tiles, 2*ti)
    wgu = jnp.transpose(wgu, (1, 0, 2))           # (n_tiles, H, 2*ti)
    return wgu, wd


# ---------------------------------------------------------------------------
# Fused forward.
# ---------------------------------------------------------------------------
def llama2_mlp(x, wgu, wd, *, tm=None):
    """Fused Llama2 MLP forward.

    x:   (..., hidden)
    wgu: (n_tiles, hidden, 2*ti)  from prepare_weights
    wd:  (I_pad, hidden)          from prepare_weights
    """
    orig_shape = x.shape
    orig_dtype = x.dtype
    hidden = orig_shape[-1]

    n_tiles, hidden_w, two_ti = wgu.shape
    ti = two_ti // 2
    i_pad = wd.shape[0]
    assert hidden_w == hidden, "weight hidden dim mismatch"
    assert i_pad == n_tiles * ti, "wd / wgu intermediate dims inconsistent"

    compute_dtype = wgu.dtype
    x2 = x.reshape(-1, hidden)
    if x2.dtype != compute_dtype:
        x2 = x2.astype(compute_dtype)      # MXU-native (bf16) activations
    m = x2.shape[0]

    device_kind = _device_kind()
    vmem_cap = _vmem_capacity_bytes()

    if tm is None:
        tm = _pick_tm(m, hidden, ti, compute_dtype, device_kind, vmem_cap)

    m_pad = _round_up(m, tm)
    if m_pad != m:
        x2 = jnp.pad(x2, ((0, m_pad - m), (0, 0)))  # zero rows -> zero output

    grid = (m_pad // tm, n_tiles)

    # Generation-aware VMEM budget: actual tile footprint + margin, capped at
    # ~90% of this chip's per-core VMEM (never the old fixed 100 MiB, which
    # exceeds v7x's 64 MiB).  Floor at 32 MiB (v5e default scoped limit is
    # only 16 MiB).
    footprint = _vmem_bytes(tm, ti, hidden, compute_dtype)
    vmem_limit = int(min(1.15 * footprint + (2 << 20), 0.9 * vmem_cap))
    vmem_limit = max(vmem_limit, 32 << 20)
    vmem_limit = min(vmem_limit, vmem_cap)

    kernel = functools.partial(_fused_mlp_kernel, ti=ti)

    # NOTE: once MXU-bound (large tm), pipeline_mode=pl.Buffered(3) on the
    # weight specs can hide the weight-DMA restart at each M-tile boundary if
    # the trace shows waits there (costs ~+1 panel of VMEM).
    y = pl.pallas_call(
        kernel,
        out_shape=jax.ShapeDtypeStruct((m_pad, hidden), orig_dtype),
        grid_spec=pltpu.PrefetchScalarGridSpec(
            num_scalar_prefetch=0,
            grid=grid,
            in_specs=[
                pl.BlockSpec((tm, hidden), lambda mi, ii: (mi, 0)),      # x
                pl.BlockSpec((None, hidden, 2 * ti),                      # [Wg|Wu]
                             lambda mi, ii: (ii, 0, 0)),
                pl.BlockSpec((ti, hidden), lambda mi, ii: (ii, 0)),      # Wd
            ],
            out_specs=pl.BlockSpec((tm, hidden), lambda mi, ii: (mi, 0)),
            scratch_shapes=[pltpu.VMEM((tm, hidden), jnp.float32)],
        ),
        compiler_params=pltpu.CompilerParams(
            dimension_semantics=("parallel", "arbitrary"),
            vmem_limit_bytes=vmem_limit),
    )(x2, wgu, wd)

    if m_pad != m:
        y = y[:m]
    return y.reshape(orig_shape)


# ---------------------------------------------------------------------------
# Pure-JAX reference (torch.nn.Linear layout: weight is (out, in)).
# ---------------------------------------------------------------------------
def llama2_mlp_ref(x, w_gate, w_up, w_down):
    g = jnp.einsum("bsh,ih->bsi", x, w_gate)
    u = jnp.einsum("bsh,ih->bsi", x, w_up)
    h = (g * jax.nn.sigmoid(g)) * u
    return jnp.einsum("bsi,hi->bsh", h, w_down)


if __name__ == "__main__":
    # Small, TPU-tile-friendly stand-ins for hidden=4096 / intermediate=11008.
    batch, seq = 2, 8
    hidden_size = 256
    intermediate_size = 512

    key = jax.random.PRNGKey(0)
    kx, kg, ku, kd = jax.random.split(key, 4)

    x = jax.random.normal(kx, (batch, seq, hidden_size), dtype=jnp.float32)
    # torch.nn.Linear weight layout: (out_features, in_features)
    w_gate = jax.random.normal(kg, (intermediate_size, hidden_size),
                               dtype=jnp.float32) * 0.02
    w_up = jax.random.normal(ku, (intermediate_size, hidden_size),
                             dtype=jnp.float32) * 0.02
    w_down = jax.random.normal(kd, (hidden_size, intermediate_size),
                               dtype=jnp.float32) * 0.02

    ref = llama2_mlp_ref(x, w_gate, w_up, w_down)
    mlp = jax.jit(llama2_mlp)

    # f32 weight path: tight numerical check against the reference.
    wgu32, wd32 = prepare_weights(w_gate, w_up, w_down, dtype=jnp.float32)
    out32 = jax.block_until_ready(mlp(x, wgu32, wd32))
    assert out32.shape == (batch, seq, hidden_size)
    assert jnp.allclose(out32, ref, atol=1e-4, rtol=1e-4), "f32 mismatch vs ref"

    # Production path: bf16 weights/activations, f32 accumulation + epilogue.
    wgu16, wd16 = prepare_weights(w_gate, w_up, w_down)          # bf16 default
    out16 = jax.block_until_ready(mlp(x, wgu16, wd16))
    assert out16.shape == (batch, seq, hidden_size)
    assert jnp.allclose(out16, ref, atol=5e-2, rtol=5e-2), "bf16 mismatch vs ref"

    print("KERNEL_OK")
</pallas_src>

<mosaic_0001>
module attributes {stable_mosaic.version = 11 : i64} {
  func.func @_fused_mlp_kernel(%arg0: i32, %arg1: i32, %arg2: memref<16x256xf32, #tpu.memory_space<vmem>>, %arg3: memref<1x256x1024xf32, #tpu.memory_space<vmem>>, %arg4: memref<512x256xf32, #tpu.memory_space<vmem>>, %arg5: memref<16x256xf32, #tpu.memory_space<vmem>>, %arg6: memref<16x256xf32, #tpu.memory_space<vmem>>) attributes {dimension_semantics = [#tpu.dimension_semantics<parallel>, #tpu.dimension_semantics<arbitrary>], iteration_bounds = array<i64: 1, 1>, scalar_prefetch = 0 : i64, scratch_operands = 1 : i64, tpu.core_type = #tpu.core_type<tc>, window_params = [{transform_indices = @transform_0, window_bounds = array<i64: 16, 256>}, {transform_indices = @transform_1, window_bounds = array<i64: 1, 256, 1024>}, {transform_indices = @transform_2, window_bounds = array<i64: 512, 256>}, {transform_indices = @transform_3, window_bounds = array<i64: 16, 256>}]} {
    %c0_i32 = arith.constant 0 : i32
    %0 = arith.cmpi eq, %arg1, %c0_i32 : i32
    %1 = arith.extui %0 : i1 to i32
    %c0_i32_0 = arith.constant 0 : i32
    %2 = arith.cmpi ne, %1, %c0_i32_0 : i32
    scf.if %2 {
      %cst_15 = arith.constant 0.000000e+00 : f32
      %24 = vector.broadcast %cst_15 : f32 to vector<16x256xf32>
      %c0_16 = arith.constant 0 : index
      %c0_17 = arith.constant 0 : index
      %25 = vector.load %arg6[%c0_16, %c0_17] : memref<16x256xf32, #tpu.memory_space<vmem>>, vector<16x256xf32>
      tpu.vector_store %arg6[%c0_16, %c0_17], %24 {strides = array<i32>} : memref<16x256xf32, #tpu.memory_space<vmem>>, vector<16x256xf32>,
    } else {
    }
    %c0 = arith.constant 0 : index
    %c0_1 = arith.constant 0 : index
    %3 = vector.load %arg2[%c0, %c0_1] : memref<16x256xf32, #tpu.memory_space<vmem>>, vector<16x256xf32>
    %c0_2 = arith.constant 0 : index
    %c0_3 = arith.constant 0 : index
    %c0_4 = arith.constant 0 : index
    %4 = vector.load %arg3[%c0_2, %c0_3, %c0_4] : memref<1x256x1024xf32, #tpu.memory_space<vmem>>, vector<1x256x1024xf32>
    %5 = vector.shape_cast %4 : vector<1x256x1024xf32> to vector<256x1024xf32>
    %cst = arith.constant dense<0.000000e+00> : vector<16x1024xf32>
    %6 = tpu.matmul %3, %5, %cst {dimension_numbers = #tpu.dot_dimension_numbers<[1], [0], [0], [1], [0, 0, 1, 1], [], []>} : vector<16x256xf32>, vector<256x1024xf32>, vector<16x1024xf32> -> vector<16x1024xf32>
    %7 = vector.extract_strided_slice %6 {offsets = [0, 0], sizes = [16, 512], strides = [1, 1]} : vector<16x1024xf32> to vector<16x512xf32>
    %8 = vector.extract_strided_slice %6 {offsets = [0, 512], sizes = [16, 512], strides = [1, 1]} : vector<16x1024xf32> to vector<16x512xf32>
    %9 = arith.negf %7 : vector<16x512xf32>
    %10 = math.exp %9 : vector<16x512xf32>
    %cst_5 = arith.constant 1.000000e+00 : f32
    %11 = vector.broadcast %cst_5 : f32 to vector<16x512xf32>
    %12 = arith.addf %11, %10 : vector<16x512xf32>
    %13 = arith.divf %11, %12 : vector<16x512xf32>
    %14 = arith.mulf %7, %13 : vector<16x512xf32>
    %15 = arith.mulf %14, %8 : vector<16x512xf32>
    %c0_6 = arith.constant 0 : index
    %c0_7 = arith.constant 0 : index
    %16 = vector.load %arg6[%c0_6, %c0_7] : memref<16x256xf32, #tpu.memory_space<vmem>>, vector<16x256xf32>
    %c0_8 = arith.constant 0 : index
    %c0_9 = arith.constant 0 : index
    %17 = vector.load %arg4[%c0_8, %c0_9] : memref<512x256xf32, #tpu.memory_space<vmem>>, vector<512x256xf32>
    %cst_10 = arith.constant dense<0.000000e+00> : vector<16x256xf32>
    %18 = tpu.matmul %15, %17, %cst_10 {dimension_numbers = #tpu.dot_dimension_numbers<[1], [0], [0], [1], [0, 0, 1, 1], [], []>} : vector<16x512xf32>, vector<512x256xf32>, vector<16x256xf32> -> vector<16x256xf32>
    %19 = arith.addf %16, %18 : vector<16x256xf32>
    %c0_11 = arith.constant 0 : index
    %c0_12 = arith.constant 0 : index
    %20 = vector.load %arg6[%c0_11, %c0_12] : memref<16x256xf32, #tpu.memory_space<vmem>>, vector<16x256xf32>
    tpu.vector_store %arg6[%c0_11, %c0_12], %19 {strides = array<i32>} : memref<16x256xf32, #tpu.memory_space<vmem>>, vector<16x256xf32>,
    %c0_i32_13 = arith.constant 0 : i32
    %21 = arith.cmpi eq, %arg1, %c0_i32_13 : i32
    %22 = arith.extui %21 : i1 to i32
    %c0_i32_14 = arith.constant 0 : i32
    %23 = arith.cmpi ne, %22, %c0_i32_14 : i32
    scf.if %23 {
      %c0_15 = arith.constant 0 : index
      %c0_16 = arith.constant 0 : index
      %24 = vector.load %arg6[%c0_15, %c0_16] : memref<16x256xf32, #tpu.memory_space<vmem>>, vector<16x256xf32>
      %c0_17 = arith.constant 0 : index
      %c0_18 = arith.constant 0 : index
      %25 = vector.load %arg5[%c0_17, %c0_18] : memref<16x256xf32, #tpu.memory_space<vmem>>, vector<16x256xf32>
      tpu.vector_store %arg5[%c0_17, %c0_18], %24 {strides = array<i32>} : memref<16x256xf32, #tpu.memory_space<vmem>>, vector<16x256xf32>,
    } else {
    }
    return
  }
  func.func @transform_0(%arg0: i32, %arg1: i32) -> (i32, i32) {
    %c0_i32 = arith.constant 0 : i32
    %c0_i32_0 = arith.constant 0 : i32
    return %arg0, %c0_i32 : i32, i32
  }
  func.func @transform_1(%arg0: i32, %arg1: i32) -> (i32, i32, i32) {
    %c0_i32 = arith.constant 0 : i32
    %c0_i32_0 = arith.constant 0 : i32
    %c0_i32_1 = arith.constant 0 : i32
    return %arg1, %c0_i32, %c0_i32_0 : i32, i32, i32
  }
  func.func @transform_2(%arg0: i32, %arg1: i32) -> (i32, i32) {
    %c0_i32 = arith.constant 0 : i32
    %c0_i32_0 = arith.constant 0 : i32
    return %arg1, %c0_i32 : i32, i32
  }
  func.func @transform_3(%arg0: i32, %arg1: i32) -> (i32, i32) {
    %c0_i32 = arith.constant 0 : i32
    %c0_i32_0 = arith.constant 0 : i32
    return %arg0, %c0_i32 : i32, i32
  }
}

</mosaic_0001>

<llo_original>
// kernel: llama2_mlp.1
$region0: #{llama2_mlp.1}
  #allocation0 [shape = 'u32[]', space=smem, size = 0x4, offset = 0x4, fixed_abs, tag = 'smem constant byte address 0x4 - core index']
  #allocation1 [shape = 'u32[144,128]{1,0:T(1,128)}', space=vmem, size = 0x12000, scoped, tag = 'internal scratch']
  #allocation2 [shape = 'f32[16,256]{1,0:T(8,128)}', space=vmem, size = 0x4000, scoped, tag = 'scratch operand']
  %s0 = inlined_call_operand.hbm [shape: f32[16,256], index: 0, kind: input, shape index: {}]
  %s1 = inlined_call_operand.hbm [shape: f32[1,256,1024], index: 1, kind: input, shape index: {}]
  %s2 = inlined_call_operand.hbm [shape: f32[512,256], index: 2, kind: input, shape index: {}]
  %s3 = inlined_call_operand.hbm [shape: f32[16,256], index: 3, kind: output, shape index: {}]
  %s4 = sld [smem:[#allocation0]]
  $region42: #{llama2_mlp.1} parent=0
    _
  %s6 = ssub.s32 1, %s4
  %s7 = scalar_select 0, %s6, %s4
  $region1: #{llama2_mlp.1} parent=0
    #allocation3 [shape = 'u8[16384]{0}', space=vmem, size = 0x4000, scoped, tag = 'input window, operand 0, single buffered']
    #allocation4 [shape = 's32[1]{0}', space=sflag, size = 0x4, scoped, tag = 'scoped memory for llama2_mlp.1']
    #allocation5 [shape = 's32[1]{0}', space=sflag, size = 0x4, scoped, tag = 'scoped memory for llama2_mlp.1']
    #allocation6 [shape = 'u8[1048576]{0}', space=vmem, size = 0x100000, scoped, tag = 'input window, operand 1, single buffered']
    #allocation7 [shape = 's32[1]{0}', space=sflag, size = 0x4, scoped, tag = 'scoped memory for llama2_mlp.1']
    #allocation8 [shape = 'u8[524288]{0}', space=vmem, size = 0x80000, scoped, tag = 'input window, operand 2, single buffered']
    #allocation9 [shape = 'u8[16384]{0}', space=vmem, size = 0x4000, scoped, tag = 'output window, operand 0, single buffered']
    %8 = vsyncpa [#allocation4], 0
    %9 = vsyncpa [#allocation7], 0
    %10 = vsyncpa [#allocation5], 0
    // Predicated region
    $region2: #{llama2_mlp.1} parent=1 // pred_check
      _
    $region3: #{llama2_mlp.1} parent=1 // pred_check_branch
      %12 = sbr.rel (0) target = $region5
    $region4: #{llama2_mlp.1} parent=1 // pred_region
      %s14 = ssub.s32 512, 512
      %15 = vsyncadd [#allocation4], %s14
      %s16 = sshll.u32 [#allocation3], 4
      %s17 = int_to_ptr.vmem [resolvable:$true] %s16
      %22 = dma.hbm_to_vmem [thread:$0]  %s0, 512, %s17, [#allocation4], 256, 256, 16
    $region5: #{llama2_mlp.1} parent=1 // pred_fallthru
      _
    // Predicated region
    $region6: #{llama2_mlp.1} parent=1 // pred_check
      _
    $region7: #{llama2_mlp.1} parent=1 // pred_check_branch
      %24 = sbr.rel (0) target = $region9
    $region8: #{llama2_mlp.1} parent=1 // pred_region
      %s26 = ssub.s32 32768, 32768
      %27 = vsyncadd [#allocation7], %s26
      %s28 = sshll.u32 [#allocation6], 4
      %s29 = int_to_ptr.vmem [resolvable:$true] %s28
      %34 = dma.hbm_to_vmem [thread:$0]  %s1, 32768, %s29, [#allocation7], 1024, 1024, 64
    $region9: #{llama2_mlp.1} parent=1 // pred_fallthru
      _
    // Predicated region
    $region10: #{llama2_mlp.1} parent=1 // pred_check
      _
    $region11: #{llama2_mlp.1} parent=1 // pred_check_branch
      %36 = sbr.rel (0) target = $region13
    $region12: #{llama2_mlp.1} parent=1 // pred_region
      %s38 = ssub.s32 16384, 16384
      %39 = vsyncadd [#allocation7], %s38
      %s40 = sshll.u32 [#allocation8], 4
      %s41 = int_to_ptr.vmem [resolvable:$true] %s40
      %46 = dma.hbm_to_vmem [thread:$0]  %s2, 16384, %s41, [#allocation7], 256, 256, 16
    $region13: #{llama2_mlp.1} parent=1 // pred_fallthru
      _
    // Predicated region
    $region14: #{llama2_mlp.1} parent=1 // pred_check
      _
    $region15: #{llama2_mlp.1} parent=1 // pred_check_branch
      %48 = sbr.rel (0) target = $region17
    $region16: #{llama2_mlp.1} parent=1 // pred_region
      %49 = dma.done [#allocation4], 512
    $region17: #{llama2_mlp.1} parent=1 // pred_fallthru
      _
    // Predicated region
    $region18: #{llama2_mlp.1} parent=1 // pred_check
      _
    $region19: #{llama2_mlp.1} parent=1 // pred_check_branch
      %51 = sbr.rel (0) target = $region21
    $region20: #{llama2_mlp.1} parent=1 // pred_region
      %52 = dma.done [#allocation7], 32768
    $region21: #{llama2_mlp.1} parent=1 // pred_fallthru
      _
    // Predicated region
    $region22: #{llama2_mlp.1} parent=1 // pred_check
      _
    $region23: #{llama2_mlp.1} parent=1 // pred_check_branch
      %54 = sbr.rel (0) target = $region25
    $region24: #{llama2_mlp.1} parent=1 // pred_region
      %55 = dma.done [#allocation7], 16384
    $region25: #{llama2_mlp.1} parent=1 // pred_fallthru
      _
    %p56 = scmp.eq.s32.totalorder 0, 0
    // Predicated region
    $region26: #{llama2_mlp.1} parent=1 // pred_check
      %p57 = pneg %p56
    $region27: #{llama2_mlp.1} parent=1 // pred_check_branch
      %59 = sbr.rel (%p57) target = $region29
    $region28: #{llama2_mlp.1} parent=1 // pred_region
      %60 = vst [vmem:[#allocation2] sm:$0xff] 0.0
      %61 = vst [vmem:[#allocation2 + $0x8] sm:$0xff] 0.0
      %62 = vst [vmem:[#allocation2 + $0x10] sm:$0xff] 0.0
      %63 = vst [vmem:[#allocation2 + $0x18] sm:$0xff] 0.0
    $region29: #{llama2_mlp.1} parent=1 // pred_fallthru
      _
    %v64 = vld [vmem:[#allocation3] sm:$0xff]
    %v65 = vld [vmem:[#allocation3 + $0x8] sm:$0xff]
    %v66 = vld [vmem:[#allocation3 + $0x10] sm:$0xff]
    %v67 = vld [vmem:[#allocation3 + $0x18] sm:$0xff]
    %v68 = vld [vmem:[#allocation6] sm:$0xff]
    %v69 = vld [vmem:[#allocation6 + $0x8] sm:$0xff]
    %v70 = vld [vmem:[#allocation6 + $0x10] sm:$0xff]
    %v71 = vld [vmem:[#allocation6 + $0x18] sm:$0xff]
    %v72 = vld [vmem:[#allocation6 + $0x20] sm:$0xff]
    %v73 = vld [vmem:[#allocation6 + $0x28] sm:$0xff]
    %v74 = vld [vmem:[#allocation6 + $0x30] sm:$0xff]
    %v75 = vld [vmem:[#allocation6 + $0x38] sm:$0xff]
    %v76 = vld [vmem:[#allocation6 + $0x40] sm:$0xff]
    %v77 = vld [vmem:[#allocation6 + $0x48] sm:$0xff]
    %v78 = vld [vmem:[#allocation6 + $0x50] sm:$0xff]
    %v79 = vld [vmem:[#allocation6 + $0x58] sm:$0xff]
    %v80 = vld [vmem:[#allocation6 + $0x60] sm:$0xff]
    %v81 = vld [vmem:[#allocation6 + $0x68] sm:$0xff]
    %v82 = vld [vmem:[#allocation6 + $0x70] sm:$0xff]
    %v83 = vld [vmem:[#allocation6 + $0x78] sm:$0xff]
    %v84 = vld [vmem:[#allocation6 + $0x80] sm:$0xff]
    %v85 = vld [vmem:[#allocation6 + $0x88] sm:$0xff]
    %v86 = vld [vmem:[#allocation6 + $0x90] sm:$0xff]
    %v87 = vld [vmem:[#allocation6 + $0x98] sm:$0xff]
    %v88 = vld [vmem:[#allocation6 + $0xa0] sm:$0xff]
    %v89 = vld [vmem:[#allocation6 + $0xa8] sm:$0xff]
    %v90 = vld [vmem:[#allocation6 + $0xb0] sm:$0xff]
    %v91 = vld [vmem:[#allocation6 + $0xb8] sm:$0xff]
    %v92 = vld [vmem:[#allocation6 + $0xc0] sm:$0xff]
    %v93 = vld [vmem:[#allocation6 + $0xc8] sm:$0xff]
    %v94 = vld [vmem:[#allocation6 + $0xd0] sm:$0xff]
    %v95 = vld [vmem:[#allocation6 + $0xd8] sm:$0xff]
    %v96 = vld [vmem:[#allocation6 + $0xe0] sm:$0xff]
    %v97 = vld [vmem:[#allocation6 + $0xe8] sm:$0xff]
    %v98 = vld [vmem:[#allocation6 + $0xf0] sm:$0xff]
    %v99 = vld [vmem:[#allocation6 + $0xf8] sm:$0xff]
    %v100 = vld [vmem:[#allocation6 + $0x100] sm:$0xff]
    %v101 = vld [vmem:[#allocation6 + $0x108] sm:$0xff]
    %v102 = vld [vmem:[#allocation6 + $0x110] sm:$0xff]
    %v103 = vld [vmem:[#allocation6 + $0x118] sm:$0xff]
    %v104 = vld [vmem:[#allocation6 + $0x120] sm:$0xff]
    %v105 = vld [vmem:[#allocation6 + $0x128] sm:$0xff]
    %v106 = vld [vmem:[#allocation6 + $0x130] sm:$0xff]
    %v107 = vld [vmem:[#allocation6 + $0x138] sm:$0xff]
    %v108 = vld [vmem:[#allocation6 + $0x140] sm:$0xff]
    %v109 = vld [vmem:[#allocation6 + $0x148] sm:$0xff]
    %v110 = vld [vmem:[#allocation6 + $0x150] sm:$0xff]
    %v111 = vld [vmem:[#allocation6 + $0x158] sm:$0xff]
    %v112 = vld [vmem:[#allocation6 + $0x160] sm:$0xff]
    %v113 = vld [vmem:[#allocation6 + $0x168] sm:$0xff]
    %v114 = vld [vmem:[#allocation6 + $0x170] sm:$0xff]
    %v115 = vld [vmem:[#allocation6 + $0x178] sm:$0xff]
    %v116 = vld [vmem:[#allocation6 + $0x180] sm:$0xff]
    %v117 = vld [vmem:[#allocation6 + $0x188] sm:$0xff]
    %v118 = vld [vmem:[#allocation6 + $0x190] sm:$0xff]
    %v119 = vld [vmem:[#allocation6 + $0x198] sm:$0xff]
    %v120 = vld [vmem:[#allocation6 + $0x1a0] sm:$0xff]
    %v121 = vld [vmem:[#allocation6 + $0x1a8] sm:$0xff]
    %v122 = vld [vmem:[#allocation6 + $0x1b0] sm:$0xff]
    %v123 = vld [vmem:[#allocation6 + $0x1b8] sm:$0xff]
    %v124 = vld [vmem:[#allocation6 + $0x1c0] sm:$0xff]
    %v125 = vld [vmem:[#allocation6 + $0x1c8] sm:$0xff]
    %v126 = vld [vmem:[#allocation6 + $0x1d0] sm:$0xff]
    %v127 = vld [vmem:[#allocation6 + $0x1d8] sm:$0xff]
    %v128 = vld [vmem:[#allocation6 + $0x1e0] sm:$0xff]
    %v129 = vld [vmem:[#allocation6 + $0x1e8] sm:$0xff]
    %v130 = vld [vmem:[#allocation6 + $0x1f0] sm:$0xff]
    %v131 = vld [vmem:[#allocation6 + $0x1f8] sm:$0xff]
    %v132 = vld [vmem:[#allocation6 + $0x200] sm:$0xff]
    %v133 = vld [vmem:[#allocation6 + $0x208] sm:$0xff]
    %v134 = vld [vmem:[#allocation6 + $0x210] sm:$0xff]
    %v135 = vld [vmem:[#allocation6 + $0x218] sm:$0xff]
    %v136 = vld [vmem:[#allocation6 + $0x220] sm:$0xff]
    %v137 = vld [vmem:[#allocation6 + $0x228] sm:$0xff]
    %v138 = vld [vmem:[#allocation6 + $0x230] sm:$0xff]
    %v139 = vld [vmem:[#allocation6 + $0x238] sm:$0xff]
    %v140 = vld [vmem:[#allocation6 + $0x240] sm:$0xff]
    %v141 = vld [vmem:[#allocation6 + $0x248] sm:$0xff]
    %v142 = vld [vmem:[#allocation6 + $0x250] sm:$0xff]
    %v143 = vld [vmem:[#allocation6 + $0x258] sm:$0xff]
    %v144 = vld [vmem:[#allocation6 + $0x260] sm:$0xff]
    %v145 = vld [vmem:[#allocation6 + $0x268] sm:$0xff]
    %v146 = vld [vmem:[#allocation6 + $0x270] sm:$0xff]
    %v147 = vld [vmem:[#allocation6 + $0x278] sm:$0xff]
    %v148 = vld [vmem:[#allocation6 + $0x280] sm:$0xff]
    %v149 = vld [vmem:[#allocation6 + $0x288] sm:$0xff]
    %v150 = vld [vmem:[#allocation6 + $0x290] sm:$0xff]
    %v151 = vld [vmem:[#allocation6 + $0x298] sm:$0xff]
    %v152 = vld [vmem:[#allocation6 + $0x2a0] sm:$0xff]
    %v153 = vld [vmem:[#allocation6 + $0x2a8] sm:$0xff]
    %v154 = vld [vmem:[#allocation6 + $0x2b0] sm:$0xff]
    %v155 = vld [vmem:[#allocation6 + $0x2b8] sm:$0xff]
    %v156 = vld [vmem:[#allocation6 + $0x2c0] sm:$0xff]
    %v157 = vld [vmem:[#allocation6 + $0x2c8] sm:$0xff]
    %v158 = vld [vmem:[#allocation6 + $0x2d0] sm:$0xff]
    %v159 = vld [vmem:[#allocation6 + $0x2d8] sm:$0xff]
    %v160 = vld [vmem:[#allocation6 + $0x2e0] sm:$0xff]
    %v161 = vld [vmem:[#allocation6 + $0x2e8] sm:$0xff]
    %v162 = vld [vmem:[#allocation6 + $0x2f0] sm:$0xff]
    %v163 = vld [vmem:[#allocation6 + $0x2f8] sm:$0xff]
    %v164 = vld [vmem:[#allocation6 + $0x300] sm:$0xff]
    %v165 = vld [vmem:[#allocation6 + $0x308] sm:$0xff]
    %v166 = vld [vmem:[#allocation6 + $0x310] sm:$0xff]
    %v167 = vld [vmem:[#allocation6 + $0x318] sm:$0xff]
    %v168 = vld [vmem:[#allocation6 + $0x320] sm:$0xff]
    %v169 = vld [vmem:[#allocation6 + $0x328] sm:$0xff]
    %v170 = vld [vmem:[#allocation6 + $0x330] sm:$0xff]
    %v171 = vld [vmem:[#allocation6 + $0x338] sm:$0xff]
    %v172 = vld [vmem:[#allocation6 + $0x340] sm:$0xff]
    %v173 = vld [vmem:[#allocation6 + $0x348] sm:$0xff]
    %v174 = vld [vmem:[#allocation6 + $0x350] sm:$0xff]
    %v175 = vld [vmem:[#allocation6 + $0x358] sm:$0xff]
    %v176 = vld [vmem:[#allocation6 + $0x360] sm:$0xff]
    %v177 = vld [vmem:[#allocation6 + $0x368] sm:$0xff]
    %v178 = vld [vmem:[#allocation6 + $0x370] sm:$0xff]
    %v179 = vld [vmem:[#allocation6 + $0x378] sm:$0xff]
    %v180 = vld [vmem:[#allocation6 + $0x380] sm:$0xff]
    %v181 = vld [vmem:[#allocation6 + $0x388] sm:$0xff]
    %v182 = vld [vmem:[#allocation6 + $0x390] sm:$0xff]
    %v183 = vld [vmem:[#allocation6 + $0x398] sm:$0xff]
    %v184 = vld [vmem:[#allocation6 + $0x3a0] sm:$0xff]
    %v185 = vld [vmem:[#allocation6 + $0x3a8] sm:$0xff]
    %v186 = vld [vmem:[#allocation6 + $0x3b0] sm:$0xff]
    %v187 = vld [vmem:[#allocation6 + $0x3b8] sm:$0xff]
    %v188 = vld [vmem:[#allocation6 + $0x3c0] sm:$0xff]
    %v189 = vld [vmem:[#allocation6 + $0x3c8] sm:$0xff]
    %v190 = vld [vmem:[#allocation6 + $0x3d0] sm:$0xff]
    %v191 = vld [vmem:[#allocation6 + $0x3d8] sm:$0xff]
    %v192 = vld [vmem:[#allocation6 + $0x3e0] sm:$0xff]
    %v193 = vld [vmem:[#allocation6 + $0x3e8] sm:$0xff]
    %v194 = vld [vmem:[#allocation6 + $0x3f0] sm:$0xff]
    %v195 = vld [vmem:[#allocation6 + $0x3f8] sm:$0xff]
    %v196 = vld [vmem:[#allocation6 + $0x400] sm:$0xff]
    %v197 = vld [vmem:[#allocation6 + $0x408] sm:$0xff]
    %v198 = vld [vmem:[#allocation6 + $0x410] sm:$0xff]
    %v199 = vld [vmem:[#allocation6 + $0x418] sm:$0xff]
    %v200 = vld [vmem:[#allocation6 + $0x420] sm:$0xff]
    %v201 = vld [vmem:[#allocation6 + $0x428] sm:$0xff]
    %v202 = vld [vmem:[#allocation6 + $0x430] sm:$0xff]
    %v203 = vld [vmem:[#allocation6 + $0x438] sm:$0xff]
    %v204 = vld [vmem:[#allocation6 + $0x440] sm:$0xff]
    %v205 = vld [vmem:[#allocation6 + $0x448] sm:$0xff]
    %v206 = vld [vmem:[#allocation6 + $0x450] sm:$0xff]
    %v207 = vld [vmem:[#allocation6 + $0x458] sm:$0xff]
    %v208 = vld [vmem:[#allocation6 + $0x460] sm:$0xff]
    %v209 = vld [vmem:[#allocation6 + $0x468] sm:$0xff]
    %v210 = vld [vmem:[#allocation6 + $0x470] sm:$0xff]
    %v211 = vld [vmem:[#allocation6 + $0x478] sm:$0xff]
    %v212 = vld [vmem:[#allocation6 + $0x480] sm:$0xff]
    %v213 = vld [vmem:[#allocation6 + $0x488] sm:$0xff]
    %v214 = vld [vmem:[#allocation6 + $0x490] sm:$0xff]
    %v215 = vld [vmem:[#allocation6 + $0x498] sm:$0xff]
    %v216 = vld [vmem:[#allocation6 + $0x4a0] sm:$0xff]
    %v217 = vld [vmem:[#allocation6 + $0x4a8] sm:$0xff]
    %v218 = vld [vmem:[#allocation6 + $0x4b0] sm:$0xff]
    %v219 = vld [vmem:[#allocation6 + $0x4b8] sm:$0xff]
    %v220 = vld [vmem:[#allocation6 + $0x4c0] sm:$0xff]
    %v221 = vld [vmem:[#allocation6 + $0x4c8] sm:$0xff]
    %v222 = vld [vmem:[#allocation6 + $0x4d0] sm:$0xff]
    %v223 = vld [vmem:[#allocation6 + $0x4d8] sm:$0xff]
    %v224 = vld [vmem:[#allocation6 + $0x4e0] sm:$0xff]
    %v225 = vld [vmem:[#allocation6 + $0x4e8] sm:$0xff]
    %v226 = vld [vmem:[#allocation6 + $0x4f0] sm:$0xff]
    %v227 = vld [vmem:[#allocation6 + $0x4f8] sm:$0xff]
    %v228 = vld [vmem:[#allocation6 + $0x500] sm:$0xff]
    %v229 = vld [vmem:[#allocation6 + $0x508] sm:$0xff]
    %v230 = vld [vmem:[#allocation6 + $0x510] sm:$0xff]
    %v231 = vld [vmem:[#allocation6 + $0x518] sm:$0xff]
    %v232 = vld [vmem:[#allocation6 + $0x520] sm:$0xff]
    %v233 = vld [vmem:[#allocation6 + $0x528] sm:$0xff]
    %v234 = vld [vmem:[#allocation6 + $0x530] sm:$0xff]
    %v235 = vld [vmem:[#allocation6 + $0x538] sm:$0xff]
    %v236 = vld [vmem:[#allocation6 + $0x540] sm:$0xff]
    %v237 = vld [vmem:[#allocation6 + $0x548] sm:$0xff]
    %v238 = vld [vmem:[#allocation6 + $0x550] sm:$0xff]
    %v239 = vld [vmem:[#allocation6 + $0x558] sm:$0xff]
    %v240 = vld [vmem:[#allocation6 + $0x560] sm:$0xff]
    %v241 = vld [vmem:[#allocation6 + $0x568] sm:$0xff]
    %v242 = vld [vmem:[#allocation6 + $0x570] sm:$0xff]
    %v243 = vld [vmem:[#allocation6 + $0x578] sm:$0xff]
    %v244 = vld [vmem:[#allocation6 + $0x580] sm:$0xff]
    %v245 = vld [vmem:[#allocation6 + $0x588] sm:$0xff]
    %v246 = vld [vmem:[#allocation6 + $0x590] sm:$0xff]
    %v247 = vld [vmem:[#allocation6 + $0x598] sm:$0xff]
    %v248 = vld [vmem:[#allocation6 + $0x5a0] sm:$0xff]
    %v249 = vld [vmem:[#allocation6 + $0x5a8] sm:$0xff]
    %v250 = vld [vmem:[#allocation6 + $0x5b0] sm:$0xff]
    %v251 = vld [vmem:[#allocation6 + $0x5b8] sm:$0xff]
    %v252 = vld [vmem:[#allocation6 + $0x5c0] sm:$0xff]
    %v253 = vld [vmem:[#allocation6 + $0x5c8] sm:$0xff]
    %v254 = vld [vmem:[#allocation6 + $0x5d0] sm:$0xff]
    %v255 = vld [vmem:[#allocation6 + $0x5d8] sm:$0xff]
    %v256 = vld [vmem:[#allocation6 + $0x5e0] sm:$0xff]
    %v257 = vld [vmem:[#allocation6 + $0x5e8] sm:$0xff]
    %v258 = vld [vmem:[#allocation6 + $0x5f0] sm:$0xff]
    %v259 = vld [vmem:[#allocation6 + $0x5f8] sm:$0xff]
    %v260 = vld [vmem:[#allocation6 + $0x600] sm:$0xff]
    %v261 = vld [vmem:[#allocation6 + $0x608] sm:$0xff]
    %v262 = vld [vmem:[#allocation6 + $0x610] sm:$0xff]
    %v263 = vld [vmem:[#allocation6 + $0x618] sm:$0xff]
    %v264 = vld [vmem:[#allocation6 + $0x620] sm:$0xff]
    %v265 = vld [vmem:[#allocation6 + $0x628] sm:$0xff]
    %v266 = vld [vmem:[#allocation6 + $0x630] sm:$0xff]
    %v267 = vld [vmem:[#allocation6 + $0x638] sm:$0xff]
    %v268 = vld [vmem:[#allocation6 + $0x640] sm:$0xff]
    %v269 = vld [vmem:[#allocation6 + $0x648] sm:$0xff]
    %v270 = vld [vmem:[#allocation6 + $0x650] sm:$0xff]
    %v271 = vld [vmem:[#allocation6 + $0x658] sm:$0xff]
    %v272 = vld [vmem:[#allocation6 + $0x660] sm:$0xff]
    %v273 = vld [vmem:[#allocation6 + $0x668] sm:$0xff]
    %v274 = vld [vmem:[#allocation6 + $0x670] sm:$0xff]
    %v275 = vld [vmem:[#allocation6 + $0x678] sm:$0xff]
    %v276 = vld [vmem:[#allocation6 + $0x680] sm:$0xff]
    %v277 = vld [vmem:[#allocation6 + $0x688] sm:$0xff]
    %v278 = vld [vmem:[#allocation6 + $0x690] sm:$0xff]
    %v279 = vld [vmem:[#allocation6 + $0x698] sm:$0xff]
    %v280 = vld [vmem:[#allocation6 + $0x6a0] sm:$0xff]
    %v281 = vld [vmem:[#allocation6 + $0x6a8] sm:$0xff]
    %v282 = vld [vmem:[#allocation6 + $0x6b0] sm:$0xff]
    %v283 = vld [vmem:[#allocation6 + $0x6b8] sm:$0xff]
    %v284 = vld [vmem:[#allocation6 + $0x6c0] sm:$0xff]
    %v285 = vld [vmem:[#allocation6 + $0x6c8] sm:$0xff]
    %v286 = vld [vmem:[#allocation6 + $0x6d0] sm:$0xff]
    %v287 = vld [vmem:[#allocation6 + $0x6d8] sm:$0xff]
    %v288 = vld [vmem:[#allocation6 + $0x6e0] sm:$0xff]
    %v289 = vld [vmem:[#allocation6 + $0x6e8] sm:$0xff]
    %v290 = vld [vmem:[#allocation6 + $0x6f0] sm:$0xff]
    %v291 = vld [vmem:[#allocation6 + $0x6f8] sm:$0xff]
    %v292 = vld [vmem:[#allocation6 + $0x700] sm:$0xff]
    %v293 = vld [vmem:[#allocation6 + $0x708] sm:$0xff]
    %v294 = vld [vmem:[#allocation6 + $0x710] sm:$0xff]
    %v295 = vld [vmem:[#allocation6 + $0x718] sm:$0xff]
    %v296 = vld [vmem:[#allocation6 + $0x720] sm:$0xff]
    %v297 = vld [vmem:[#allocation6 + $0x728] sm:$0xff]
    %v298 = vld [vmem:[#allocation6 + $0x730] sm:$0xff]
    %v299 = vld [vmem:[#allocation6 + $0x738] sm:$0xff]
    %v300 = vld [vmem:[#allocation6 + $0x740] sm:$0xff]
    %v301 = vld [vmem:[#allocation6 + $0x748] sm:$0xff]
    %v302 = vld [vmem:[#allocation6 + $0x750] sm:$0xff]
    %v303 = vld [vmem:[#allocation6 + $0x758] sm:$0xff]
    %v304 = vld [vmem:[#allocation6 + $0x760] sm:$0xff]
    %v305 = vld [vmem:[#allocation6 + $0x768] sm:$0xff]
    %v306 = vld [vmem:[#allocation6 + $0x770] sm:$0xff]
    %v307 = vld [vmem:[#allocation6 + $0x778] sm:$0xff]
    %v308 = vld [vmem:[#allocation6 + $0x780] sm:$0xff]
    %v309 = vld [vmem:[#allocation6 + $0x788] sm:$0xff]
    %v310 = vld [vmem:[#allocation6 + $0x790] sm:$0xff]
    %v311 = vld [vmem:[#allocation6 + $0x798] sm:$0xff]
    %v312 = vld [vmem:[#allocation6 + $0x7a0] sm:$0xff]
    %v313 = vld [vmem:[#allocation6 + $0x7a8] sm:$0xff]
    %v314 = vld [vmem:[#allocation6 + $0x7b0] sm:$0xff]
    %v315 = vld [vmem:[#allocation6 + $0x7b8] sm:$0xff]
    %v316 = vld [vmem:[#allocation6 + $0x7c0] sm:$0xff]
    %v317 = vld [vmem:[#allocation6 + $0x7c8] sm:$0xff]
    %v318 = vld [vmem:[#allocation6 + $0x7d0] sm:$0xff]
    %v319 = vld [vmem:[#allocation6 + $0x7d8] sm:$0xff]
    %v320 = vld [vmem:[#allocation6 + $0x7e0] sm:$0xff]
    %v321 = vld [vmem:[#allocation6 + $0x7e8] sm:$0xff]
    %v322 = vld [vmem:[#allocation6 + $0x7f0] sm:$0xff]
    %v323 = vld [vmem:[#allocation6 + $0x7f8] sm:$0xff]
    %324 = vmatprep.subr.mxu0 %v69
    %325 = vmatpush1.msra.mxu0 %v68
    %326 = vmatprep.subr.mxu0 %v77
    %327 = vmatpush1.msra.mxu0 %v76
    %328 = vmatprep.subr.mxu0 %v85
    %329 = vmatpush1.msra.mxu0 %v84
    %330 = vmatprep.subr.mxu0 %v93
    %331 = vmatpush1.msra.mxu0 %v92
    %332 = vmatprep.subr.mxu0 %v101
    %333 = vmatpush1.msra.mxu0 %v100
    %334 = vmatprep.subr.mxu0 %v109
    %335 = vmatpush1.msra.mxu0 %v108
    %336 = vmatprep.subr.mxu0 %v117
    %337 = vmatpush1.msra.mxu0 %v116
    %338 = vmatprep.subr.mxu0 %v125
    %339 = vmatpush1.msra.mxu0 %v124
    %340 = vmatprep.subr.mxu0 %v133
    %341 = vmatpush1.msra.mxu0 %v132
    %342 = vmatprep.subr.mxu0 %v141
    %343 = vmatpush1.msra.mxu0 %v140
    %344 = vmatprep.subr.mxu0 %v149
    %345 = vmatpush1.msra.mxu0 %v148
    %346 = vmatprep.subr.mxu0 %v157
    %347 = vmatpush1.msra.mxu0 %v156
    %348 = vmatprep.subr.mxu0 %v165
    %349 = vmatpush1.msra.mxu0 %v164
    %350 = vmatprep.subr.mxu0 %v173
    %351 = vmatpush1.msra.mxu0 %v172
    %352 = vmatprep.subr.mxu0 %v181
    %353 = vmatpush1.msra.mxu0 %v180
    %354 = vmatprep.subr.mxu0 %v189
    %355 = vmatpush1.msra.mxu0 %v188
    %356 = vmatprep.subr.mxu0 %v197
    %357 = vmatpush1.msra.mxu0 %v196
    %358 = vmatprep.subr.mxu0 %v205
    %359 = vmatpush1.msra.mxu0 %v204
    %360 = vmatprep.subr.mxu0 %v213
    %361 = vmatpush1.msra.mxu0 %v212
    %362 = vmatprep.subr.mxu0 %v221
    %363 = vmatpush1.msra.mxu0 %v220
    %364 = vmatprep.subr.mxu0 %v229
    %365 = vmatpush1.msra.mxu0 %v228
    %366 = vmatprep.subr.mxu0 %v237
    %367 = vmatpush1.msra.mxu0 %v236
    %368 = vmatprep.subr.mxu0 %v245
    %369 = vmatpush1.msra.mxu0 %v244
    %370 = vmatprep.subr.mxu0 %v253
    %371 = vmatpush1.msra.mxu0 %v252
    %372 = vmatprep.subr.mxu0 %v261
    %373 = vmatpush1.msra.mxu0 %v260
    %374 = vmatprep.subr.mxu0 %v269
    %375 = vmatpush1.msra.mxu0 %v268
    %376 = vmatprep.subr.mxu0 %v277
    %377 = vmatpush1.msra.mxu0 %v276
    %378 = vmatprep.subr.mxu0 %v285
    %379 = vmatpush1.msra.mxu0 %v284
    %380 = vmatprep.subr.mxu0 %v293
    %381 = vmatpush1.msra.mxu0 %v292
    %382 = vmatprep.subr.mxu0 %v301
    %383 = vmatpush1.msra.mxu0 %v300
    %384 = vmatprep.subr.mxu0 %v309
    %385 = vmatpush1.msra.mxu0 %v308
    %386 = vmatprep.subr.mxu0 %v317
    %387 = vmatpush1.msra.mxu0 %v316
    %388 = vmatprep.mubr.f32.mxu0 %v65
    %389 = vmatmul.mubr.f32.gmra.mrb[0].mxu0 %v64
    %v390 = vpop.f32.mrb[0].mxu0
    %v391 = vadd.f32 0.0, %v390
    %v392 = vpop.f32.mrb[0].mxu0
    %v393 = vadd.f32 0.0, %v392
    %394 = vmatprep.mubr.f32.mxu0 %v67
    %395 = vmatmul.mubr.f32.gmra.mrb[0].mxu0 %v66
    %v396 = vpop.f32.mrb[0].mxu0
    %v397 = vadd.f32 0.0, %v396
    %v398 = vpop.f32.mrb[0].mxu0
    %v399 = vadd.f32 0.0, %v398
    %400 = vdwg.mxu0
    %401 = vmatprep.subr.mxu0 %v71
    %402 = vmatpush1.msra.mxu0 %v70
    %403 = vmatprep.subr.mxu0 %v79
    %404 = vmatpush1.msra.mxu0 %v78
    %405 = vmatprep.subr.mxu0 %v87
    %406 = vmatpush1.msra.mxu0 %v86
    %407 = vmatprep.subr.mxu0 %v95
    %408 = vmatpush1.msra.mxu0 %v94
    %409 = vmatprep.subr.mxu0 %v103
    %410 = vmatpush1.msra.mxu0 %v102
    %411 = vmatprep.subr.mxu0 %v111
    %412 = vmatpush1.msra.mxu0 %v110
    %413 = vmatprep.subr.mxu0 %v119
    %414 = vmatpush1.msra.mxu0 %v118
    %415 = vmatprep.subr.mxu0 %v127
    %416 = vmatpush1.msra.mxu0 %v126
    %417 = vmatprep.subr.mxu0 %v135
    %418 = vmatpush1.msra.mxu0 %v134
    %419 = vmatprep.subr.mxu0 %v143
    %420 = vmatpush1.msra.mxu0 %v142
    %421 = vmatprep.subr.mxu0 %v151
    %422 = vmatpush1.msra.mxu0 %v150
    %423 = vmatprep.subr.mxu0 %v159
    %424 = vmatpush1.msra.mxu0 %v158
    %425 = vmatprep.subr.mxu0 %v167
    %426 = vmatpush1.msra.mxu0 %v166
    %427 = vmatprep.subr.mxu0 %v175
    %428 = vmatpush1.msra.mxu0 %v174
    %429 = vmatprep.subr.mxu0 %v183
    %430 = vmatpush1.msra.mxu0 %v182
    %431 = vmatprep.subr.mxu0 %v191
    %432 = vmatpush1.msra.mxu0 %v190
    %433 = vmatprep.subr.mxu0 %v199
    %434 = vmatpush1.msra.mxu0 %v198
    %435 = vmatprep.subr.mxu0 %v207
    %436 = vmatpush1.msra.mxu0 %v206
    %437 = vmatprep.subr.mxu0 %v215
    %438 = vmatpush1.msra.mxu0 %v214
    %439 = vmatprep.subr.mxu0 %v223
    %440 = vmatpush1.msra.mxu0 %v222
    %441 = vmatprep.subr.mxu0 %v231
    %442 = vmatpush1.msra.mxu0 %v230
    %443 = vmatprep.subr.mxu0 %v239
    %444 = vmatpush1.msra.mxu0 %v238
    %445 = vmatprep.subr.mxu0 %v247
    %446 = vmatpush1.msra.mxu0 %v246
    %447 = vmatprep.subr.mxu0 %v255
    %448 = vmatpush1.msra.mxu0 %v254
    %449 = vmatprep.subr.mxu0 %v263
    %450 = vmatpush1.msra.mxu0 %v262
    %451 = vmatprep.subr.mxu0 %v271
    %452 = vmatpush1.msra.mxu0 %v270
    %453 = vmatprep.subr.mxu0 %v279
    %454 = vmatpush1.msra.mxu0 %v278
    %455 = vmatprep.subr.mxu0 %v287
    %456 = vmatpush1.msra.mxu0 %v286
    %457 = vmatprep.subr.mxu0 %v295
    %458 = vmatpush1.msra.mxu0 %v294
    %459 = vmatprep.subr.mxu0 %v303
    %460 = vmatpush1.msra.mxu0 %v302
    %461 = vmatprep.subr.mxu0 %v311
    %462 = vmatpush1.msra.mxu0 %v310
    %463 = vmatprep.subr.mxu0 %v319
    %464 = vmatpush1.msra.mxu0 %v318
    %465 = vmatprep.mubr.f32.mxu0 %v65
    %466 = vmatmul.mubr.f32.gmra.mrb[0].mxu0 %v64
    %v467 = vpop.f32.mrb[0].mxu0
    %v468 = vadd.f32 0.0, %v467
    %v469 = vpop.f32.mrb[0].mxu0
    %v470 = vadd.f32 0.0, %v469
    %471 = vmatprep.mubr.f32.mxu0 %v67
    %472 = vmatmul.mubr.f32.gmra.mrb[0].mxu0 %v66
    %v473 = vpop.f32.mrb[0].mxu0
    %v474 = vadd.f32 0.0, %v473
    %v475 = vpop.f32.mrb[0].mxu0
    %v476 = vadd.f32 0.0, %v475
    %477 = vdwg.mxu0
    %478 = vmatprep.subr.mxu0 %v73
    %479 = vmatpush1.msra.mxu0 %v72
    %480 = vmatprep.subr.mxu0 %v81
    %481 = vmatpush1.msra.mxu0 %v80
    %482 = vmatprep.subr.mxu0 %v89
    %483 = vmatpush1.msra.mxu0 %v88
    %484 = vmatprep.subr.mxu0 %v97
    %485 = vmatpush1.msra.mxu0 %v96
    %486 = vmatprep.subr.mxu0 %v105
    %487 = vmatpush1.msra.mxu0 %v104
    %488 = vmatprep.subr.mxu0 %v113
    %489 = vmatpush1.msra.mxu0 %v112
    %490 = vmatprep.subr.mxu0 %v121
    %491 = vmatpush1.msra.mxu0 %v120
    %492 = vmatprep.subr.mxu0 %v129
    %493 = vmatpush1.msra.mxu0 %v128
    %494 = vmatprep.subr.mxu0 %v137
    %495 = vmatpush1.msra.mxu0 %v136
    %496 = vmatprep.subr.mxu0 %v145
    %497 = vmatpush1.msra.mxu0 %v144
    %498 = vmatprep.subr.mxu0 %v153
    %499 = vmatpush1.msra.mxu0 %v152
    %500 = vmatprep.subr.mxu0 %v161
    %501 = vmatpush1.msra.mxu0 %v160
    %502 = vmatprep.subr.mxu0 %v169
    %503 = vmatpush1.msra.mxu0 %v168
    %504 = vmatprep.subr.mxu0 %v177
    %505 = vmatpush1.msra.mxu0 %v176
    %506 = vmatprep.subr.mxu0 %v185
    %507 = vmatpush1.msra.mxu0 %v184
    %508 = vmatprep.subr.mxu0 %v193
    %509 = vmatpush1.msra.mxu0 %v192
    %510 = vmatprep.subr.mxu0 %v201
    %511 = vmatpush1.msra.mxu0 %v200
    %512 = vmatprep.subr.mxu0 %v209
    %513 = vmatpush1.msra.mxu0 %v208
    %514 = vmatprep.subr.mxu0 %v217
    %515 = vmatpush1.msra.mxu0 %v216
    %516 = vmatprep.subr.mxu0 %v225
    %517 = vmatpush1.msra.mxu0 %v224
    %518 = vmatprep.subr.mxu0 %v233
    %519 = vmatpush1.msra.mxu0 %v232
    %520 = vmatprep.subr.mxu0 %v241
    %521 = vmatpush1.msra.mxu0 %v240
    %522 = vmatprep.subr.mxu0 %v249
    %523 = vmatpush1.msra.mxu0 %v248
    %524 = vmatprep.subr.mxu0 %v257
    %525 = vmatpush1.msra.mxu0 %v256
    %526 = vmatprep.subr.mxu0 %v265
    %527 = vmatpush1.msra.mxu0 %v264
    %528 = vmatprep.subr.mxu0 %v273
    %529 = vmatpush1.msra.mxu0 %v272
    %530 = vmatprep.subr.mxu0 %v281
    %531 = vmatpush1.msra.mxu0 %v280
    %532 = vmatprep.subr.mxu0 %v289
    %533 = vmatpush1.msra.mxu0 %v288
    %534 = vmatprep.subr.mxu0 %v297
    %535 = vmatpush1.msra.mxu0 %v296
    %536 = vmatprep.subr.mxu0 %v305
    %537 = vmatpush1.msra.mxu0 %v304
    %538 = vmatprep.subr.mxu0 %v313
    %539 = vmatpush1.msra.mxu0 %v312
    %540 = vmatprep.subr.mxu0 %v321
    %541 = vmatpush1.msra.mxu0 %v320
    %542 = vmatprep.mubr.f32.mxu0 %v65
    %543 = vmatmul.mubr.f32.gmra.mrb[0].mxu0 %v64
    %v544 = vpop.f32.mrb[0].mxu0
    %v545 = vadd.f32 0.0, %v544
    %v546 = vpop.f32.mrb[0].mxu0
    %v547 = vadd.f32 0.0, %v546
    %548 = vmatprep.mubr.f32.mxu0 %v67
    %549 = vmatmul.mubr.f32.gmra.mrb[0].mxu0 %v66
    %v550 = vpop.f32.mrb[0].mxu0
    %v551 = vadd.f32 0.0, %v550
    %v552 = vpop.f32.mrb[0].mxu0
    %v553 = vadd.f32 0.0, %v552
    %554 = vdwg.mxu0
    %555 = vmatprep.subr.mxu0 %v75
    %556 = vmatpush1.msra.mxu0 %v74
    %557 = vmatprep.subr.mxu0 %v83
    %558 = vmatpush1.msra.mxu0 %v82
    %559 = vmatprep.subr.mxu0 %v91
    %560 = vmatpush1.msra.mxu0 %v90
    %561 = vmatprep.subr.mxu0 %v99
    %562 = vmatpush1.msra.mxu0 %v98
    %563 = vmatprep.subr.mxu0 %v107
    %564 = vmatpush1.msra.mxu0 %v106
    %565 = vmatprep.subr.mxu0 %v115
    %566 = vmatpush1.msra.mxu0 %v114
    %567 = vmatprep.subr.mxu0 %v123
    %568 = vmatpush1.msra.mxu0 %v122
    %569 = vmatprep.subr.mxu0 %v131
    %570 = vmatpush1.msra.mxu0 %v130
    %571 = vmatprep.subr.mxu0 %v139
    %572 = vmatpush1.msra.mxu0 %v138
    %573 = vmatprep.subr.mxu0 %v147
    %574 = vmatpush1.msra.mxu0 %v146
    %575 = vmatprep.subr.mxu0 %v155
    %576 = vmatpush1.msra.mxu0 %v154
    %577 = vmatprep.subr.mxu0 %v163
    %578 = vmatpush1.msra.mxu0 %v162
    %579 = vmatprep.subr.mxu0 %v171
    %580 = vmatpush1.msra.mxu0 %v170
    %581 = vmatprep.subr.mxu0 %v179
    %582 = vmatpush1.msra.mxu0 %v178
    %583 = vmatprep.subr.mxu0 %v187
    %584 = vmatpush1.msra.mxu0 %v186
    %585 = vmatprep.subr.mxu0 %v195
    %586 = vmatpush1.msra.mxu0 %v194
    %587 = vmatprep.subr.mxu0 %v203
    %588 = vmatpush1.msra.mxu0 %v202
    %589 = vmatprep.subr.mxu0 %v211
    %590 = vmatpush1.msra.mxu0 %v210
    %591 = vmatprep.subr.mxu0 %v219
    %592 = vmatpush1.msra.mxu0 %v218
    %593 = vmatprep.subr.mxu0 %v227
    %594 = vmatpush1.msra.mxu0 %v226
    %595 = vmatprep.subr.mxu0 %v235
    %596 = vmatpush1.msra.mxu0 %v234
    %597 = vmatprep.subr.mxu0 %v243
    %598 = vmatpush1.msra.mxu0 %v242
    %599 = vmatprep.subr.mxu0 %v251
    %600 = vmatpush1.msra.mxu0 %v250
    %601 = vmatprep.subr.mxu0 %v259
    %602 = vmatpush1.msra.mxu0 %v258
    %603 = vmatprep.subr.mxu0 %v267
    %604 = vmatpush1.msra.mxu0 %v266
    %605 = vmatprep.subr.mxu0 %v275
    %606 = vmatpush1.msra.mxu0 %v274
    %607 = vmatprep.subr.mxu0 %v283
    %608 = vmatpush1.msra.mxu0 %v282
    %609 = vmatprep.subr.mxu0 %v291
    %610 = vmatpush1.msra.mxu0 %v290
    %611 = vmatprep.subr.mxu0 %v299
    %612 = vmatpush1.msra.mxu0 %v298
    %613 = vmatprep.subr.mxu0 %v307
    %614 = vmatpush1.msra.mxu0 %v306
    %615 = vmatprep.subr.mxu0 %v315
    %616 = vmatpush1.msra.mxu0 %v314
    %617 = vmatprep.subr.mxu0 %v323
    %618 = vmatpush1.msra.mxu0 %v322
    %619 = vmatprep.mubr.f32.mxu0 %v65
    %620 = vmatmul.mubr.f32.gmra.mrb[0].mxu0 %v64
    %v621 = vpop.f32.mrb[0].mxu0
    %v622 = vadd.f32 0.0, %v621
    %v623 = vpop.f32.mrb[0].mxu0
    %v624 = vadd.f32 0.0, %v623
    %625 = vmatprep.mubr.f32.mxu0 %v67
    %626 = vmatmul.mubr.f32.gmra.mrb[0].mxu0 %v66
    %v627 = vpop.f32.mrb[0].mxu0
    %v628 = vadd.f32 0.0, %v627
    %v629 = vpop.f32.mrb[0].mxu0
    %v630 = vadd.f32 0.0, %v629
    %631 = vdwg.mxu0
    %v632 = vxor.u32 %v391, 2147483648
    %v633 = vxor.u32 %v393, 2147483648
    %v634 = vxor.u32 %v468, 2147483648
    %v635 = vxor.u32 %v470, 2147483648
    %v636 = vxor.u32 %v397, 2147483648
    %v637 = vxor.u32 %v399, 2147483648
    %v638 = vxor.u32 %v474, 2147483648
    %v639 = vxor.u32 %v476, 2147483648
    %v640 = vmul.f32 %v632, 1.442695
    %v641 = vpow.pop %v640
    %v642 = vmul.f32 %v633, 1.442695
    %v643 = vpow.pop %v642
    %v644 = vmul.f32 %v634, 1.442695
    %v645 = vpow.pop %v644
    %v646 = vmul.f32 %v635, 1.442695
    %v647 = vpow.pop %v646
    %v648 = vmul.f32 %v636, 1.442695
    %v649 = vpow.pop %v648
    %v650 = vmul.f32 %v637, 1.442695
    %v651 = vpow.pop %v650
    %v652 = vmul.f32 %v638, 1.442695
    %v653 = vpow.pop %v652
    %v654 = vmul.f32 %v639, 1.442695
    %v655 = vpow.pop %v654
    %v656 = vadd.f32 %v641, 1.0
    %v657 = vadd.f32 %v643, 1.0
    %v658 = vadd.f32 %v645, 1.0
    %v659 = vadd.f32 %v647, 1.0
    %v660 = vadd.f32 %v649, 1.0
    %v661 = vadd.f32 %v651, 1.0
    %v662 = vadd.f32 %v653, 1.0
    %v663 = vadd.f32 %v655, 1.0
    %v664 = vrcp.pop %v656
    %v665 = vmul.f32 1.0, %v664
    %v666 = vrcp.pop %v657
    %v667 = vmul.f32 1.0, %v666
    %v668 = vrcp.pop %v658
    %v669 = vmul.f32 1.0, %v668
    %v670 = vrcp.pop %v659
    %v671 = vmul.f32 1.0, %v670
    %v672 = vrcp.pop %v660
    %v673 = vmul.f32 1.0, %v672
    %v674 = vrcp.pop %v661
    %v675 = vmul.f32 1.0, %v674
    %v676 = vrcp.pop %v662
    %v677 = vmul.f32 1.0, %v676
    %v678 = vrcp.pop %v663
    %v679 = vmul.f32 1.0, %v678
    %v680 = vmul.f32 %v391, %v665
    %v681 = vmul.f32 %v393, %v667
    %v682 = vmul.f32 %v468, %v669
    %v683 = vmul.f32 %v470, %v671
    %v684 = vmul.f32 %v397, %v673
    %v685 = vmul.f32 %v399, %v675
    %v686 = vmul.f32 %v474, %v677
    %v687 = vmul.f32 %v476, %v679
    %v688 = vmul.f32 %v680, %v545
    %v689 = vmul.f32 %v681, %v547
    %v690 = vmul.f32 %v682, %v622
    %v691 = vmul.f32 %v683, %v624
    %v692 = vmul.f32 %v684, %v551
    %v693 = vmul.f32 %v685, %v553
    %v694 = vmul.f32 %v686, %v628
    %v695 = vmul.f32 %v687, %v630
    %v696 = vld [vmem:[#allocation2] sm:$0xff]
    %v697 = vld [vmem:[#allocation2 + $0x8] sm:$0xff]
    %v698 = vld [vmem:[#allocation2 + $0x10] sm:$0xff]
    %v699 = vld [vmem:[#allocation2 + $0x18] sm:$0xff]
    %v700 = vld [vmem:[#allocation8] sm:$0xff]
    %v701 = vld [vmem:[#allocation8 + $0x8] sm:$0xff]
    %v702 = vld [vmem:[#allocation8 + $0x10] sm:$0xff]
    %v703 = vld [vmem:[#allocation8 + $0x18] sm:$0xff]
    %v704 = vld [vmem:[#allocation8 + $0x20] sm:$0xff]
    %v705 = vld [vmem:[#allocation8 + $0x28] sm:$0xff]
    %v706 = vld [vmem:[#allocation8 + $0x30] sm:$0xff]
    %v707 = vld [vmem:[#allocation8 + $0x38] sm:$0xff]
    %v708 = vld [vmem:[#allocation8 + $0x40] sm:$0xff]
    %v709 = vld [vmem:[#allocation8 + $0x48] sm:$0xff]
    %v710 = vld [vmem:[#allocation8 + $0x50] sm:$0xff]
    %v711 = vld [vmem:[#allocation8 + $0x58] sm:$0xff]
    %v712 = vld [vmem:[#allocation8 + $0x60] sm:$0xff]
    %v713 = vld [vmem:[#allocation8 + $0x68] sm:$0xff]
    %v714 = vld [vmem:[#allocation8 + $0x70] sm:$0xff]
    %v715 = vld [vmem:[#allocation8 + $0x78] sm:$0xff]
    %v716 = vld [vmem:[#allocation8 + $0x80] sm:$0xff]
    %v717 = vld [vmem:[#allocation8 + $0x88] sm:$0xff]
    %v718 = vld [vmem:[#allocation8 + $0x90] sm:$0xff]
    %v719 = vld [vmem:[#allocation8 + $0x98] sm:$0xff]
    %v720 = vld [vmem:[#allocation8 + $0xa0] sm:$0xff]
    %v721 = vld [vmem:[#allocation8 + $0xa8] sm:$0xff]
    %v722 = vld [vmem:[#allocation8 + $0xb0] sm:$0xff]
    %v723 = vld [vmem:[#allocation8 + $0xb8] sm:$0xff]
    %v724 = vld [vmem:[#allocation8 + $0xc0] sm:$0xff]
    %v725 = vld [vmem:[#allocation8 + $0xc8] sm:$0xff]
    %v726 = vld [vmem:[#allocation8 + $0xd0] sm:$0xff]
    %v727 = vld [vmem:[#allocation8 + $0xd8] sm:$0xff]
    %v728 = vld [vmem:[#allocation8 + $0xe0] sm:$0xff]
    %v729 = vld [vmem:[#allocation8 + $0xe8] sm:$0xff]
    %v730 = vld [vmem:[#allocation8 + $0xf0] sm:$0xff]
    %v731 = vld [vmem:[#allocation8 + $0xf8] sm:$0xff]
    %v732 = vld [vmem:[#allocation8 + $0x100] sm:$0xff]
    %v733 = vld [vmem:[#allocation8 + $0x108] sm:$0xff]
    %v734 = vld [vmem:[#allocation8 + $0x110] sm:$0xff]
    %v735 = vld [vmem:[#allocation8 + $0x118] sm:$0xff]
    %v736 = vld [vmem:[#allocation8 + $0x120] sm:$0xff]
    %v737 = vld [vmem:[#allocation8 + $0x128] sm:$0xff]
    %v738 = vld [vmem:[#allocation8 + $0x130] sm:$0xff]
    %v739 = vld [vmem:[#allocation8 + $0x138] sm:$0xff]
    %v740 = vld [vmem:[#allocation8 + $0x140] sm:$0xff]
    %v741 = vld [vmem:[#allocation8 + $0x148] sm:$0xff]
    %v742 = vld [vmem:[#allocation8 + $0x150] sm:$0xff]
    %v743 = vld [vmem:[#allocation8 + $0x158] sm:$0xff]
    %v744 = vld [vmem:[#allocation8 + $0x160] sm:$0xff]
    %v745 = vld [vmem:[#allocation8 + $0x168] sm:$0xff]
    %v746 = vld [vmem:[#allocation8 + $0x170] sm:$0xff]
    %v747 = vld [vmem:[#allocation8 + $0x178] sm:$0xff]
    %v748 = vld [vmem:[#allocation8 + $0x180] sm:$0xff]
    %v749 = vld [vmem:[#allocation8 + $0x188] sm:$0xff]
    %v750 = vld [vmem:[#allocation8 + $0x190] sm:$0xff]
    %v751 = vld [vmem:[#allocation8 + $0x198] sm:$0xff]
    %v752 = vld [vmem:[#allocation8 + $0x1a0] sm:$0xff]
    %v753 = vld [vmem:[#allocation8 + $0x1a8] sm:$0xff]
    %v754 = vld [vmem:[#allocation8 + $0x1b0] sm:$0xff]
    %v755 = vld [vmem:[#allocation8 + $0x1b8] sm:$0xff]
    %v756 = vld [vmem:[#allocation8 + $0x1c0] sm:$0xff]
    %v757 = vld [vmem:[#allocation8 + $0x1c8] sm:$0xff]
    %v758 = vld [vmem:[#allocation8 + $0x1d0] sm:$0xff]
    %v759 = vld [vmem:[#allocation8 + $0x1d8] sm:$0xff]
    %v760 = vld [vmem:[#allocation8 + $0x1e0] sm:$0xff]
    %v761 = vld [vmem:[#allocation8 + $0x1e8] sm:$0xff]
    %v762 = vld [vmem:[#allocation8 + $0x1f0] sm:$0xff]
    %v763 = vld [vmem:[#allocation8 + $0x1f8] sm:$0xff]
    %v764 = vld [vmem:[#allocation8 + $0x200] sm:$0xff]
    %v765 = vld [vmem:[#allocation8 + $0x208] sm:$0xff]
    %v766 = vld [vmem:[#allocation8 + $0x210] sm:$0xff]
    %v767 = vld [vmem:[#allocation8 + $0x218] sm:$0xff]
    %v768 = vld [vmem:[#allocation8 + $0x220] sm:$0xff]
    %v769 = vld [vmem:[#allocation8 + $0x228] sm:$0xff]
    %v770 = vld [vmem:[#allocation8 + $0x230] sm:$0xff]
    %v771 = vld [vmem:[#allocation8 + $0x238] sm:$0xff]
    %v772 = vld [vmem:[#allocation8 + $0x240] sm:$0xff]
    %v773 = vld [vmem:[#allocation8 + $0x248] sm:$0xff]
    %v774 = vld [vmem:[#allocation8 + $0x250] sm:$0xff]
    %v775 = vld [vmem:[#allocation8 + $0x258] sm:$0xff]
    %v776 = vld [vmem:[#allocation8 + $0x260] sm:$0xff]
    %v777 = vld [vmem:[#allocation8 + $0x268] sm:$0xff]
    %v778 = vld [vmem:[#allocation8 + $0x270] sm:$0xff]
    %v779 = vld [vmem:[#allocation8 + $0x278] sm:$0xff]
    %v780 = vld [vmem:[#allocation8 + $0x280] sm:$0xff]
    %v781 = vld [vmem:[#allocation8 + $0x288] sm:$0xff]
    %v782 = vld [vmem:[#allocation8 + $0x290] sm:$0xff]
    %v783 = vld [vmem:[#allocation8 + $0x298] sm:$0xff]
    %v784 = vld [vmem:[#allocation8 + $0x2a0] sm:$0xff]
    %v785 = vld [vmem:[#allocation8 + $0x2a8] sm:$0xff]
    %v786 = vld [vmem:[#allocation8 + $0x2b0] sm:$0xff]
    %v787 = vld [vmem:[#allocation8 + $0x2b8] sm:$0xff]
    %v788 = vld [vmem:[#allocation8 + $0x2c0] sm:$0xff]
    %v789 = vld [vmem:[#allocation8 + $0x2c8] sm:$0xff]
    %v790 = vld [vmem:[#allocation8 + $0x2d0] sm:$0xff]
    %v791 = vld [vmem:[#allocation8 + $0x2d8] sm:$0xff]
    %v792 = vld [vmem:[#allocation8 + $0x2e0] sm:$0xff]
    %v793 = vld [vmem:[#allocation8 + $0x2e8] sm:$0xff]
    %v794 = vld [vmem:[#allocation8 + $0x2f0] sm:$0xff]
    %v795 = vld [vmem:[#allocation8 + $0x2f8] sm:$0xff]
    %v796 = vld [vmem:[#allocation8 + $0x300] sm:$0xff]
    %v797 = vld [vmem:[#allocation8 + $0x308] sm:$0xff]
    %v798 = vld [vmem:[#allocation8 + $0x310] sm:$0xff]
    %v799 = vld [vmem:[#allocation8 + $0x318] sm:$0xff]
    %v800 = vld [vmem:[#allocation8 + $0x320] sm:$0xff]
    %v801 = vld [vmem:[#allocation8 + $0x328] sm:$0xff]
    %v802 = vld [vmem:[#allocation8 + $0x330] sm:$0xff]
    %v803 = vld [vmem:[#allocation8 + $0x338] sm:$0xff]
    %v804 = vld [vmem:[#allocation8 + $0x340] sm:$0xff]
    %v805 = vld [vmem:[#allocation8 + $0x348] sm:$0xff]
    %v806 = vld [vmem:[#allocation8 + $0x350] sm:$0xff]
    %v807 = vld [vmem:[#allocation8 + $0x358] sm:$0xff]
    %v808 = vld [vmem:[#allocation8 + $0x360] sm:$0xff]
    %v809 = vld [vmem:[#allocation8 + $0x368] sm:$0xff]
    %v810 = vld [vmem:[#allocation8 + $0x370] sm:$0xff]
    %v811 = vld [vmem:[#allocation8 + $0x378] sm:$0xff]
    %v812 = vld [vmem:[#allocation8 + $0x380] sm:$0xff]
    %v813 = vld [vmem:[#allocation8 + $0x388] sm:$0xff]
    %v814 = vld [vmem:[#allocation8 + $0x390] sm:$0xff]
    %v815 = vld [vmem:[#allocation8 + $0x398] sm:$0xff]
    %v816 = vld [vmem:[#allocation8 + $0x3a0] sm:$0xff]
    %v817 = vld [vmem:[#allocation8 + $0x3a8] sm:$0xff]
    %v818 = vld [vmem:[#allocation8 + $0x3b0] sm:$0xff]
    %v819 = vld [vmem:[#allocation8 + $0x3b8] sm:$0xff]
    %v820 = vld [vmem:[#allocation8 + $0x3c0] sm:$0xff]
    %v821 = vld [vmem:[#allocation8 + $0x3c8] sm:$0xff]
    %v822 = vld [vmem:[#allocation8 + $0x3d0] sm:$0xff]
    %v823 = vld [vmem:[#allocation8 + $0x3d8] sm:$0xff]
    %v824 = vld [vmem:[#allocation8 + $0x3e0] sm:$0xff]
    %v825 = vld [vmem:[#allocation8 + $0x3e8] sm:$0xff]
    %v826 = vld [vmem:[#allocation8 + $0x3f0] sm:$0xff]
    %v827 = vld [vmem:[#allocation8 + $0x3f8] sm:$0xff]
    %828 = vmatprep.subr.mxu0 %v701
    %829 = vmatpush1.msra.mxu0 %v700
    %830 = vmatprep.subr.mxu0 %v703
    %831 = vmatpush1.msra.mxu0 %v702
    %832 = vmatprep.subr.mxu0 %v705
    %833 = vmatpush1.msra.mxu0 %v704
    %834 = vmatprep.subr.mxu0 %v707
    %835 = vmatpush1.msra.mxu0 %v706
    %836 = vmatprep.subr.mxu0 %v709
    %837 = vmatpush1.msra.mxu0 %v708
    %838 = vmatprep.subr.mxu0 %v711
    %839 = vmatpush1.msra.mxu0 %v710
    %840 = vmatprep.subr.mxu0 %v713
    %841 = vmatpush1.msra.mxu0 %v712
    %842 = vmatprep.subr.mxu0 %v715
    %843 = vmatpush1.msra.mxu0 %v714
    %844 = vmatprep.subr.mxu0 %v717
    %845 = vmatpush1.msra.mxu0 %v716
    %846 = vmatprep.subr.mxu0 %v719
    %847 = vmatpush1.msra.mxu0 %v718
    %848 = vmatprep.subr.mxu0 %v721
    %849 = vmatpush1.msra.mxu0 %v720
    %850 = vmatprep.subr.mxu0 %v723
    %851 = vmatpush1.msra.mxu0 %v722
    %852 = vmatprep.subr.mxu0 %v725
    %853 = vmatpush1.msra.mxu0 %v724
    %854 = vmatprep.subr.mxu0 %v727
    %855 = vmatpush1.msra.mxu0 %v726
    %856 = vmatprep.subr.mxu0 %v729
    %857 = vmatpush1.msra.mxu0 %v728
    %858 = vmatprep.subr.mxu0 %v731
    %859 = vmatpush1.msra.mxu0 %v730
    %860 = vmatprep.subr.mxu0 %v733
    %861 = vmatpush1.msra.mxu0 %v732
    %862 = vmatprep.subr.mxu0 %v735
    %863 = vmatpush1.msra.mxu0 %v734
    %864 = vmatprep.subr.mxu0 %v737
    %865 = vmatpush1.msra.mxu0 %v736
    %866 = vmatprep.subr.mxu0 %v739
    %867 = vmatpush1.msra.mxu0 %v738
    %868 = vmatprep.subr.mxu0 %v741
    %869 = vmatpush1.msra.mxu0 %v740
    %870 = vmatprep.subr.mxu0 %v743
    %871 = vmatpush1.msra.mxu0 %v742
    %872 = vmatprep.subr.mxu0 %v745
    %873 = vmatpush1.msra.mxu0 %v744
    %874 = vmatprep.subr.mxu0 %v747
    %875 = vmatpush1.msra.mxu0 %v746
    %876 = vmatprep.subr.mxu0 %v749
    %877 = vmatpush1.msra.mxu0 %v748
    %878 = vmatprep.subr.mxu0 %v751
    %879 = vmatpush1.msra.mxu0 %v750
    %880 = vmatprep.subr.mxu0 %v753
    %881 = vmatpush1.msra.mxu0 %v752
    %882 = vmatprep.subr.mxu0 %v755
    %883 = vmatpush1.msra.mxu0 %v754
    %884 = vmatprep.subr.mxu0 %v757
    %885 = vmatpush1.msra.mxu0 %v756
    %886 = vmatprep.subr.mxu0 %v759
    %887 = vmatpush1.msra.mxu0 %v758
    %888 = vmatprep.subr.mxu0 %v761
    %889 = vmatpush1.msra.mxu0 %v760
    %890 = vmatprep.subr.mxu0 %v763
    %891 = vmatpush1.msra.mxu0 %v762
    %892 = vmatprep.mubr.f32.mxu0 %v689
    %893 = vmatmul.mubr.f32.gmra.mrb[0].mxu0 %v688
    %v894 = vpop.f32.mrb[0].mxu0
    %v895 = vadd.f32 0.0, %v894
    %v896 = vpop.f32.mrb[0].mxu0
    %v897 = vadd.f32 0.0, %v896
    %898 = vmatprep.mubr.f32.mxu0 %v693
    %899 = vmatmul.mubr.f32.gmra.mrb[0].mxu0 %v692
    %v900 = vpop.f32.mrb[0].mxu0
    %v901 = vadd.f32 0.0, %v900
    %v902 = vpop.f32.mrb[0].mxu0
    %v903 = vadd.f32 0.0, %v902
    %904 = vdwg.mxu0
    %905 = vmatprep.subr.mxu0 %v765
    %906 = vmatpush1.msra.mxu0 %v764
    %907 = vmatprep.subr.mxu0 %v767
    %908 = vmatpush1.msra.mxu0 %v766
    %909 = vmatprep.subr.mxu0 %v769
    %910 = vmatpush1.msra.mxu0 %v768
    %911 = vmatprep.subr.mxu0 %v771
    %912 = vmatpush1.msra.mxu0 %v770
    %913 = vmatprep.subr.mxu0 %v773
    %914 = vmatpush1.msra.mxu0 %v772
    %915 = vmatprep.subr.mxu0 %v775
    %916 = vmatpush1.msra.mxu0 %v774
    %917 = vmatprep.subr.mxu0 %v777
    %918 = vmatpush1.msra.mxu0 %v776
    %919 = vmatprep.subr.mxu0 %v779
    %920 = vmatpush1.msra.mxu0 %v778
    %921 = vmatprep.subr.mxu0 %v781
    %922 = vmatpush1.msra.mxu0 %v780
    %923 = vmatprep.subr.mxu0 %v783
    %924 = vmatpush1.msra.mxu0 %v782
    %925 = vmatprep.subr.mxu0 %v785
    %926 = vmatpush1.msra.mxu0 %v784
    %927 = vmatprep.subr.mxu0 %v787
    %928 = vmatpush1.msra.mxu0 %v786
    %929 = vmatprep.subr.mxu0 %v789
    %930 = vmatpush1.msra.mxu0 %v788
    %931 = vmatprep.subr.mxu0 %v791
    %932 = vmatpush1.msra.mxu0 %v790
    %933 = vmatprep.subr.mxu0 %v793
    %934 = vmatpush1.msra.mxu0 %v792
    %935 = vmatprep.subr.mxu0 %v795
    %936 = vmatpush1.msra.mxu0 %v794
    %937 = vmatprep.subr.mxu0 %v797
    %938 = vmatpush1.msra.mxu0 %v796
    %939 = vmatprep.subr.mxu0 %v799
    %940 = vmatpush1.msra.mxu0 %v798
    %941 = vmatprep.subr.mxu0 %v801
    %942 = vmatpush1.msra.mxu0 %v800
    %943 = vmatprep.subr.mxu0 %v803
    %944 = vmatpush1.msra.mxu0 %v802
    %945 = vmatprep.subr.mxu0 %v805
    %946 = vmatpush1.msra.mxu0 %v804
    %947 = vmatprep.subr.mxu0 %v807
    %948 = vmatpush1.msra.mxu0 %v806
    %949 = vmatprep.subr.mxu0 %v809
    %950 = vmatpush1.msra.mxu0 %v808
    %951 = vmatprep.subr.mxu0 %v811
    %952 = vmatpush1.msra.mxu0 %v810
    %953 = vmatprep.subr.mxu0 %v813
    %954 = vmatpush1.msra.mxu0 %v812
    %955 = vmatprep.subr.mxu0 %v815
    %956 = vmatpush1.msra.mxu0 %v814
    %957 = vmatprep.subr.mxu0 %v817
    %958 = vmatpush1.msra.mxu0 %v816
    %959 = vmatprep.subr.mxu0 %v819
    %960 = vmatpush1.msra.mxu0 %v818
    %961 = vmatprep.subr.mxu0 %v821
    %962 = vmatpush1.msra.mxu0 %v820
    %963 = vmatprep.subr.mxu0 %v823
    %964 = vmatpush1.msra.mxu0 %v822
    %965 = vmatprep.subr.mxu0 %v825
    %966 = vmatpush1.msra.mxu0 %v824
    %967 = vmatprep.subr.mxu0 %v827
    %968 = vmatpush1.msra.mxu0 %v826
    %969 = vmatprep.mubr.f32.mxu0 %v691
    %970 = vmatmul.mubr.f32.gmra.mrb[0].mxu0 %v690
    %v971 = vpop.f32.mrb[0].mxu0
    %v972 = vadd.f32 %v895, %v971
    %v973 = vpop.f32.mrb[0].mxu0
    %v974 = vadd.f32 %v897, %v973
    %975 = vmatprep.mubr.f32.mxu0 %v695
    %976 = vmatmul.mubr.f32.gmra.mrb[0].mxu0 %v694
    %v977 = vpop.f32.mrb[0].mxu0
    %v978 = vadd.f32 %v901, %v977
    %v979 = vpop.f32.mrb[0].mxu0
    %v980 = vadd.f32 %v903, %v979
    %981 = vdwg.mxu0
    %v982 = vadd.f32 %v696, %v972
    %v983 = vadd.f32 %v697, %v974
    %v984 = vadd.f32 %v698, %v978
    %v985 = vadd.f32 %v699, %v980
    %986 = vst [vmem:[#allocation2] sm:$0xff] %v982
    %987 = vst [vmem:[#allocation2 + $0x8] sm:$0xff] %v983
    %988 = vst [vmem:[#allocation2 + $0x10] sm:$0xff] %v984
    %989 = vst [vmem:[#allocation2 + $0x18] sm:$0xff] %v985
    // Predicated region
    $region30: #{llama2_mlp.1} parent=1 // pred_check
      %p990 = pneg %p56
    $region31: #{llama2_mlp.1} parent=1 // pred_check_branch
      %992 = sbr.rel (%p990) target = $region33
    $region32: #{llama2_mlp.1} parent=1 // pred_region
      %v993 = vld [vmem:[#allocation2] sm:$0xff]
      %v994 = vld [vmem:[#allocation2 + $0x8] sm:$0xff]
      %v995 = vld [vmem:[#allocation2 + $0x10] sm:$0xff]
      %v996 = vld [vmem:[#allocation2 + $0x18] sm:$0xff]
      %997 = vst [vmem:[#allocation9] sm:$0xff] %v993
      %998 = vst [vmem:[#allocation9 + $0x8] sm:$0xff] %v994
      %999 = vst [vmem:[#allocation9 + $0x10] sm:$0xff] %v995
      %1000 = vst [vmem:[#allocation9 + $0x18] sm:$0xff] %v996
    $region33: #{llama2_mlp.1} parent=1 // pred_fallthru
      _
    // Predicated region
    $region34: #{llama2_mlp.1} parent=1 // pred_check
      _
    $region35: #{llama2_mlp.1} parent=1 // pred_check_branch
      %1002 = sbr.rel (0) target = $region37
    $region36: #{llama2_mlp.1} parent=1 // pred_region
      %s1004 = ssub.s32 512, 512
      %1005 = vsyncadd [#allocation5], %s1004
      %s1006 = sshll.u32 [#allocation9], 4
      %s1007 = int_to_ptr.vmem [resolvable:$true] %s1006
      %1012 = dma.vmem_to_hbm [thread:$0]  %s1007, 512, %s3, [#allocation5], 256, 256, 16
    $region37: #{llama2_mlp.1} parent=1 // pred_fallthru
      _
    // Predicated region
    $region38: #{llama2_mlp.1} parent=1 // pred_check
      _
    $region39: #{llama2_mlp.1} parent=1 // pred_check_branch
      %1014 = sbr.rel (0) target = $region41
    $region40: #{llama2_mlp.1} parent=1 // pred_region
      %1015 = dma.done [#allocation5], 512
    $region41: #{llama2_mlp.1} parent=1 // pred_fallthru
      _
    %1016 = vsyncpa [#allocation4], 1
    %1017 = vsyncpa [#allocation7], 1
    %1018 = vsyncpa [#allocation5], 1

</llo_original>
